<compile_context>
chip_gen: v5e
topology: v5e:2x2
jax: 0.10.0
libtpu: 0.0.40
codegen_flags: <defaults>
</compile_context>

<pallas_src>
import functools

import jax
import jax.numpy as jnp
from jax.experimental import pallas as pl
from jax.experimental.pallas import tpu as pltpu


def _round_up(x, m):
    return ((x + m - 1) // m) * m


def _select_tiles():
    """Pick (tm, tile_v, vmem_limit_bytes) per TPU generation."""
    default_vmem = 64 * 1024 * 1024
    try:
        info = pltpu.get_tpu_info()
        vmem_bytes = getattr(info, "vmem_capacity_bytes", default_vmem)
    except Exception:  # pragma: no cover - query unavailable
        vmem_bytes = default_vmem
    if vmem_bytes >= 100 * 1024 * 1024:      # v5e / v6e: 128 MiB VMEM
        return 512, 1024, 96 * 1024 * 1024
    return 256, 512, 40 * 1024 * 1024        # v7x: 64 MiB VMEM (or unknown)


# --------------------------------------------------------------------------
# Fused kernel:
#   j == 0 : h_scratch = gelu(x @ W1 + b1)        (once per M tile)
#   all j  : out       = h_scratch @ W2_j + b2_j  (lane-dense vocab tile)
# --------------------------------------------------------------------------
def fused_lm_head_kernel(x_ref, w1_ref, b1_ref, w2_ref, b2_ref, out_ref, h_ref):
    @pl.when(pl.program_id(1) == 0)
    def _():
        h = jnp.dot(x_ref[...], w1_ref[...], preferred_element_type=jnp.float32)
        h = jax.nn.gelu(h + b1_ref[...])          # f32 bias add + GELU (EUP)
        h_ref[...] = h.astype(h_ref.dtype)        # keep bf16 in VMEM scratch

    acc = jnp.dot(h_ref[...], w2_ref[...], preferred_element_type=jnp.float32)
    out_ref[...] = (acc + b2_ref[...]).astype(out_ref.dtype)


def lm_head_forward(x_flat, w1b, b1f, w2b, b2f, *, vocab_size, tm, tile_v,
                    vmem_limit, out_dtype):
    """x_flat: [M, H] f32 -> logits [M, V] via one fused Pallas kernel.

    w2b / b2f arrive already padded to V_pad = multiple of tile_v, bf16/f32.
    """
    M, H = x_flat.shape
    FF = w1b.shape[1]
    V_pad = w2b.shape[1]

    # ---- M tiling (multiples of 16 for bf16 sublane packing) ----
    tm = min(tm, _round_up(M, 16))
    M_pad = _round_up(M, tm)

    xb = x_flat.astype(jnp.bfloat16)
    if M_pad != M:
        xb = jnp.pad(xb, ((0, M_pad - M), (0, 0)))

    n_m = M_pad // tm
    n_v = V_pad // tile_v
    out_itemsize = jnp.dtype(out_dtype).itemsize

    flops = 2 * M_pad * H * FF + 2 * M_pad * FF * V_pad
    bytes_accessed = (
        M_pad * H * 2 + H * FF * 2 + FF * 4                 # x, W1, b1
        + n_m * (FF * V_pad * 2 + V_pad * 4)                # W2/b2 re-read factor
        + M_pad * V_pad * out_itemsize)                     # logits write

    logits = pl.pallas_call(
        fused_lm_head_kernel,
        out_shape=jax.ShapeDtypeStruct((M_pad, V_pad), out_dtype),
        grid_spec=pltpu.PrefetchScalarGridSpec(
            num_scalar_prefetch=0,
            grid=(n_m, n_v),
            in_specs=[
                pl.BlockSpec((tm, H), lambda i, j: (i, 0)),       # x tile (bf16)
                pl.BlockSpec((H, FF), lambda i, j: (0, 0)),       # W1 (resident)
                pl.BlockSpec((1, FF), lambda i, j: (0, 0)),       # b1 (f32)
                pl.BlockSpec((FF, tile_v), lambda i, j: (0, j)),  # W2 vocab tile
                pl.BlockSpec((1, tile_v), lambda i, j: (0, j)),   # b2 vocab tile
            ],
            out_specs=pl.BlockSpec((tm, tile_v), lambda i, j: (i, j)),
            scratch_shapes=[pltpu.VMEM((tm, FF), jnp.bfloat16)],  # h scratch
        ),
        compiler_params=pltpu.CompilerParams(
            dimension_semantics=("parallel", "arbitrary"),
            vmem_limit_bytes=vmem_limit),
        cost_estimate=pl.CostEstimate(
            flops=flops,
            transcendentals=M_pad * FF,
            bytes_accessed=bytes_accessed),
    )(xb, w1b, b1f, w2b, b2f)

    if M_pad != M or V_pad != vocab_size:
        logits = logits[:M, :vocab_size]
    return logits


@functools.partial(
    jax.jit,
    static_argnames=("vocab_size", "tm", "tile_v", "vmem_limit", "out_dtype"))
def _forward_impl(input_ids, embedding, w1b, b1f, w2b, b2f, *,
                  vocab_size, tm, tile_v, vmem_limit, out_dtype):
    B, S = input_ids.shape
    H = embedding.shape[1]
    # Embedding gather (glue, plain JAX).
    x_flat = embedding[input_ids].reshape(B * S, H)          # [M, H] f32
    logits = lm_head_forward(
        x_flat, w1b, b1f, w2b, b2f,
        vocab_size=vocab_size, tm=tm, tile_v=tile_v,
        vmem_limit=vmem_limit, out_dtype=out_dtype)
    return {"logits": logits.reshape(B, S, vocab_size)}


class PallasBaseModel:
    """Concrete stand-in for the abstract RLHF BaseModel."""

    def __init__(self, vocab_size=256, hidden=32, ff=128, key=None,
                 out_dtype=jnp.float32):
        key = jax.random.PRNGKey(0) if key is None else key
        k_emb, k_w1, k_w2 = jax.random.split(key, 3)
        scale_h = 1.0 / jnp.sqrt(hidden)
        scale_f = 1.0 / jnp.sqrt(ff)

        # Canonical f32 parameters (what a trainer would update in place).
        self.embedding = jax.random.normal(
            k_emb, (vocab_size, hidden), jnp.float32) * scale_h
        self.w1 = jax.random.normal(k_w1, (hidden, ff), jnp.float32) * scale_h
        self.b1 = jnp.zeros((1, ff), jnp.float32)
        self.w2 = jax.random.normal(k_w2, (ff, vocab_size), jnp.float32) * scale_f
        self.b2 = jnp.zeros((1, vocab_size), jnp.float32)

        self.vocab_size = vocab_size
        self.hidden = hidden
        self.ff = ff
        self.out_dtype = out_dtype

        # Generation-aware tile / VMEM-budget selection (once).
        self.tm, tile_v_default, self.vmem_limit = _select_tiles()
        self.tile_v = min(tile_v_default, _round_up(vocab_size, 128))
        self._v_pad = _round_up(vocab_size, self.tile_v)

        # Pre-cast / pre-pad LM-head weights once (not per forward).
        self._w1b = self.w1.astype(jnp.bfloat16)
        self._b1f = self.b1.astype(jnp.float32)
        w2b = self.w2.astype(jnp.bfloat16)
        b2f = self.b2.astype(jnp.float32)
        if self._v_pad != vocab_size:
            w2b = jnp.pad(w2b, ((0, 0), (0, self._v_pad - vocab_size)))
            b2f = jnp.pad(b2f, ((0, 0), (0, self._v_pad - vocab_size)))
        self._w2b = w2b
        self._b2f = b2f

    def forward(self, input_ids):
        """input_ids: [B, S] int32 -> {"logits": [B, S, V]}."""
        return _forward_impl(
            input_ids, self.embedding, self._w1b, self._b1f, self._w2b,
            self._b2f,
            vocab_size=self.vocab_size, tm=self.tm, tile_v=self.tile_v,
            vmem_limit=self.vmem_limit, out_dtype=self.out_dtype)

    def get_model_size(self):
        return sum(p.size for p in
                   (self.embedding, self.w1, self.b1, self.w2, self.b2))


def reference_forward(model, input_ids):
    """Pure-JAX reference with the same bf16-operand / f32-accumulation recipe."""
    x = model.embedding[input_ids]
    B, S, H = x.shape
    xb = x.reshape(B * S, H).astype(jnp.bfloat16)
    h = jnp.dot(xb, model.w1.astype(jnp.bfloat16),
                preferred_element_type=jnp.float32) + model.b1
    h = jax.nn.gelu(h).astype(jnp.bfloat16)
    logits = jnp.dot(h, model.w2.astype(jnp.bfloat16),
                     preferred_element_type=jnp.float32) + model.b2
    return logits.reshape(B, S, -1).astype(model.out_dtype)


if __name__ == "__main__":
    key = jax.random.PRNGKey(0)
    model = PallasBaseModel(vocab_size=256, hidden=32, ff=128, key=key)

    B, S = 2, 8
    input_ids = jax.random.randint(
        jax.random.PRNGKey(1), (B, S), 0, model.vocab_size, dtype=jnp.int32)

    out = model.forward(input_ids)
    logits = jax.block_until_ready(out["logits"])

    ref = reference_forward(model, input_ids)
    assert logits.shape == (B, S, model.vocab_size)
    assert jnp.allclose(logits, ref, atol=2e-3, rtol=2e-3), (
        float(jnp.max(jnp.abs(logits - ref))))

    print("KERNEL_OK")
</pallas_src>

<mosaic_0001>
module attributes {stable_mosaic.version = 11 : i64} {
  func.func @fused_lm_head_kernel(%arg0: i32, %arg1: i32, %arg2: memref<16x32xbf16, #tpu.memory_space<vmem>>, %arg3: memref<32x128xbf16, #tpu.memory_space<vmem>>, %arg4: memref<1x128xf32, #tpu.memory_space<vmem>>, %arg5: memref<128x256xbf16, #tpu.memory_space<vmem>>, %arg6: memref<1x256xf32, #tpu.memory_space<vmem>>, %arg7: memref<16x256xf32, #tpu.memory_space<vmem>>, %arg8: memref<16x128xbf16, #tpu.memory_space<vmem>>) attributes {dimension_semantics = [#tpu.dimension_semantics<parallel>, #tpu.dimension_semantics<arbitrary>], iteration_bounds = array<i64: 1, 1>, scalar_prefetch = 0 : i64, scratch_operands = 1 : i64, tpu.core_type = #tpu.core_type<tc>, window_params = [{transform_indices = @transform_0, window_bounds = array<i64: 16, 32>}, {pipeline_mode = #tpu.pipeline_mode<synchronous>, transform_indices = @transform_1, window_bounds = array<i64: 32, 128>}, {pipeline_mode = #tpu.pipeline_mode<synchronous>, transform_indices = @transform_2, window_bounds = array<i64: 1, 128>}, {transform_indices = @transform_3, window_bounds = array<i64: 128, 256>}, {transform_indices = @transform_4, window_bounds = array<i64: 1, 256>}, {transform_indices = @transform_5, window_bounds = array<i64: 16, 256>}]} {
    %c0_i32 = arith.constant 0 : i32
    %0 = arith.cmpi eq, %arg1, %c0_i32 : i32
    %1 = arith.extui %0 : i1 to i32
    %c0_i32_0 = arith.constant 0 : i32
    %2 = arith.cmpi ne, %1, %c0_i32_0 : i32
    scf.if %2 {
      %c0_8 = arith.constant 0 : index
      %c0_9 = arith.constant 0 : index
      %10 = vector.load %arg2[%c0_8, %c0_9] : memref<16x32xbf16, #tpu.memory_space<vmem>>, vector<16x32xbf16>
      %c0_10 = arith.constant 0 : index
      %c0_11 = arith.constant 0 : index
      %11 = vector.load %arg3[%c0_10, %c0_11] : memref<32x128xbf16, #tpu.memory_space<vmem>>, vector<32x128xbf16>
      %cst_12 = arith.constant dense<0.000000e+00> : vector<16x128xf32>
      %12 = tpu.matmul %10, %11, %cst_12 {dimension_numbers = #tpu.dot_dimension_numbers<[1], [0], [0], [1], [0, 0, 1, 1], [], []>} : vector<16x32xbf16>, vector<32x128xbf16>, vector<16x128xf32> -> vector<16x128xf32>
      %c0_13 = arith.constant 0 : index
      %c0_14 = arith.constant 0 : index
      %13 = vector.load %arg4[%c0_13, %c0_14] : memref<1x128xf32, #tpu.memory_space<vmem>>, vector<1x128xf32>
      %14 = vector.broadcast %13 : vector<1x128xf32> to vector<16x128xf32>
      %15 = arith.addf %12, %14 : vector<16x128xf32>
      %16 = arith.mulf %15, %15 : vector<16x128xf32>
      %17 = arith.mulf %15, %16 : vector<16x128xf32>
      %cst_15 = arith.constant 4.471500e-02 : f32
      %18 = vector.broadcast %cst_15 : f32 to vector<16x128xf32>
      %19 = arith.mulf %18, %17 : vector<16x128xf32>
      %20 = arith.addf %15, %19 : vector<16x128xf32>
      %cst_16 = arith.constant 0.797884583 : f32
      %21 = vector.broadcast %cst_16 : f32 to vector<16x128xf32>
      %22 = arith.mulf %21, %20 : vector<16x128xf32>
      %23 = math.tanh %22 : vector<16x128xf32>
      %cst_17 = arith.constant 1.000000e+00 : f32
      %24 = vector.broadcast %cst_17 : f32 to vector<16x128xf32>
      %25 = arith.addf %24, %23 : vector<16x128xf32>
      %cst_18 = arith.constant 5.000000e-01 : f32
      %26 = vector.broadcast %cst_18 : f32 to vector<16x128xf32>
      %27 = arith.mulf %26, %25 : vector<16x128xf32>
      %28 = arith.mulf %15, %27 : vector<16x128xf32>
      %29 = arith.truncf %28 : vector<16x128xf32> to vector<16x128xbf16>
      %c0_19 = arith.constant 0 : index
      %c0_20 = arith.constant 0 : index
      %30 = vector.load %arg8[%c0_19, %c0_20] : memref<16x128xbf16, #tpu.memory_space<vmem>>, vector<16x128xbf16>
      tpu.vector_store %arg8[%c0_19, %c0_20], %29 {strides = array<i32>} : memref<16x128xbf16, #tpu.memory_space<vmem>>, vector<16x128xbf16>,
    } else {
    }
    %c0 = arith.constant 0 : index
    %c0_1 = arith.constant 0 : index
    %3 = vector.load %arg8[%c0, %c0_1] : memref<16x128xbf16, #tpu.memory_space<vmem>>, vector<16x128xbf16>
    %c0_2 = arith.constant 0 : index
    %c0_3 = arith.constant 0 : index
    %4 = vector.load %arg5[%c0_2, %c0_3] : memref<128x256xbf16, #tpu.memory_space<vmem>>, vector<128x256xbf16>
    %cst = arith.constant dense<0.000000e+00> : vector<16x256xf32>
    %5 = tpu.matmul %3, %4, %cst {dimension_numbers = #tpu.dot_dimension_numbers<[1], [0], [0], [1], [0, 0, 1, 1], [], []>} : vector<16x128xbf16>, vector<128x256xbf16>, vector<16x256xf32> -> vector<16x256xf32>
    %c0_4 = arith.constant 0 : index
    %c0_5 = arith.constant 0 : index
    %6 = vector.load %arg6[%c0_4, %c0_5] : memref<1x256xf32, #tpu.memory_space<vmem>>, vector<1x256xf32>
    %7 = vector.broadcast %6 : vector<1x256xf32> to vector<16x256xf32>
    %8 = arith.addf %5, %7 : vector<16x256xf32>
    %c0_6 = arith.constant 0 : index
    %c0_7 = arith.constant 0 : index
    %9 = vector.load %arg7[%c0_6, %c0_7] : memref<16x256xf32, #tpu.memory_space<vmem>>, vector<16x256xf32>
    tpu.vector_store %arg7[%c0_6, %c0_7], %8 {strides = array<i32>} : memref<16x256xf32, #tpu.memory_space<vmem>>, vector<16x256xf32>,
    return
  }
  func.func @transform_0(%arg0: i32, %arg1: i32) -> (i32, i32) {
    %c0_i32 = arith.constant 0 : i32
    %c0_i32_0 = arith.constant 0 : i32
    return %arg0, %c0_i32 : i32, i32
  }
  func.func @transform_1(%arg0: i32, %arg1: i32) -> (i32, i32) {
    %c0_i32 = arith.constant 0 : i32
    %c0_i32_0 = arith.constant 0 : i32
    %c0_i32_1 = arith.constant 0 : i32
    return %c0_i32, %c0_i32_0 : i32, i32
  }
  func.func @transform_2(%arg0: i32, %arg1: i32) -> (i32, i32) {
    %c0_i32 = arith.constant 0 : i32
    %c0_i32_0 = arith.constant 0 : i32
    %c0_i32_1 = arith.constant 0 : i32
    return %c0_i32, %c0_i32_0 : i32, i32
  }
  func.func @transform_3(%arg0: i32, %arg1: i32) -> (i32, i32) {
    %c0_i32 = arith.constant 0 : i32
    %c0_i32_0 = arith.constant 0 : i32
    return %c0_i32, %arg1 : i32, i32
  }
  func.func @transform_4(%arg0: i32, %arg1: i32) -> (i32, i32) {
    %c0_i32 = arith.constant 0 : i32
    %c0_i32_0 = arith.constant 0 : i32
    return %c0_i32, %arg1 : i32, i32
  }
  func.func @transform_5(%arg0: i32, %arg1: i32) -> (i32, i32) {
    %c0_i32 = arith.constant 0 : i32
    return %arg0, %arg1 : i32, i32
  }
}

</mosaic_0001>

<llo_original>
// kernel: _forward_impl.1
$region0: #{_forward_impl.1}
  #allocation0 [shape = 'u32[]', space=smem, size = 0x4, offset = 0x4, fixed_abs, tag = 'smem constant byte address 0x4 - core index']
  #allocation1 [shape = 'u32[72,128]{1,0:T(1,128)}', space=vmem, size = 0x9000, scoped, tag = 'internal scratch']
  #allocation2 [shape = 'bf16[16,128]{1,0:T(8,128)(2,1)}', space=vmem, size = 0x1000, scoped, tag = 'scratch operand']
  %s0 = inlined_call_operand.vmem [shape: bf16[16,32], index: 0, kind: input, shape index: {}]
  %s1 = inlined_call_operand.vmem [shape: bf16[32,128], index: 1, kind: input, shape index: {}]
  %s2 = inlined_call_operand.vmem [shape: f32[1,128], index: 2, kind: input, shape index: {}]
  %s3 = inlined_call_operand.vmem [shape: bf16[128,256], index: 3, kind: input, shape index: {}]
  %s4 = inlined_call_operand.vmem [shape: f32[1,256], index: 4, kind: input, shape index: {}]
  %s5 = inlined_call_operand.hbm [shape: f32[16,256], index: 5, kind: output, shape index: {}]
  %s6 = sld [smem:[#allocation0]]
  $region34: #{_forward_impl.1} parent=0
    _
  %s8 = ssub.s32 1, %s6
  %s9 = scalar_select 0, %s8, %s6
  $region1: #{_forward_impl.1} parent=0
    #allocation3 [shape = 'u8[16384]{0}', space=vmem, size = 0x4000, scoped, tag = 'output window, operand 0, single buffered']
    #allocation4 [shape = 's32[1]{0}', space=sflag, size = 0x4, scoped, tag = 'scoped memory for _forward_impl.1']
    %10 = vsyncpa [#allocation4], 0
    // Predicated region
    $region2: #{_forward_impl.1} parent=1 // pred_check
      _
    $region3: #{_forward_impl.1} parent=1 // pred_check_branch
      %12 = sbr.rel (0) target = $region5
    $region4: #{_forward_impl.1} parent=1 // pred_region
      _
    $region5: #{_forward_impl.1} parent=1 // pred_fallthru
      _
    // Predicated region
    $region6: #{_forward_impl.1} parent=1 // pred_check
      _
    $region7: #{_forward_impl.1} parent=1 // pred_check_branch
      %14 = sbr.rel (0) target = $region9
    $region8: #{_forward_impl.1} parent=1 // pred_region
      _
    $region9: #{_forward_impl.1} parent=1 // pred_fallthru
      _
    // Predicated region
    $region10: #{_forward_impl.1} parent=1 // pred_check
      _
    $region11: #{_forward_impl.1} parent=1 // pred_check_branch
      %16 = sbr.rel (0) target = $region13
    $region12: #{_forward_impl.1} parent=1 // pred_region
      _
    $region13: #{_forward_impl.1} parent=1 // pred_fallthru
      _
    // Predicated region
    $region14: #{_forward_impl.1} parent=1 // pred_check
      _
    $region15: #{_forward_impl.1} parent=1 // pred_check_branch
      %18 = sbr.rel (0) target = $region17
    $region16: #{_forward_impl.1} parent=1 // pred_region
      _
    $region17: #{_forward_impl.1} parent=1 // pred_fallthru
      _
    // Predicated region
    $region18: #{_forward_impl.1} parent=1 // pred_check
      _
    $region19: #{_forward_impl.1} parent=1 // pred_check_branch
      %20 = sbr.rel (0) target = $region21
    $region20: #{_forward_impl.1} parent=1 // pred_region
      _
    $region21: #{_forward_impl.1} parent=1 // pred_fallthru
      _
    %p22 = scmp.eq.s32.totalorder 0, 0
    // Predicated region
    $region22: #{_forward_impl.1} parent=1 // pred_check
      %p23 = pneg %p22
    $region23: #{_forward_impl.1} parent=1 // pred_check_branch
      %25 = sbr.rel (%p23) target = $region25
    $region24: #{_forward_impl.1} parent=1 // pred_region
      %v26 = vld [vmem:[%s0] sm:$0xf]
      %v27 = vld [vmem:[%s0 + $0x4] sm:$0xf]
      %v28 = vld [vmem:[%s1] sm:$0xf]
      %v29 = vld [vmem:[%s1 + $0x4] sm:$0xf]
      %v30 = vld [vmem:[%s1 + $0x8] sm:$0xf]
      %v31 = vld [vmem:[%s1 + $0xc] sm:$0xf]
      %v32 = vld [vmem:[%s2] sm:$0x1]
      %v34 = vperm.slane %v32, 0
      %v38 = vunpack.c.l.b16 %v26
      %v39 = vunpack.c.l.b16 %v27
      %v40 = vpack.c.b16 %v39, %v38
      %v45 = vunpack.c.l.b16 %v28
      %v46 = vunpack.c.l.b16 %v29
      %v47 = vunpack.c.l.b16 %v30
      %v48 = vunpack.c.l.b16 %v31
      %v49 = vpack.c.b16 %v46, %v45
      %v50 = vpack.c.b16 %v48, %v47
      %vm53 = vcmask 261120
      %v55 = vsel %vm53, %v40, 0
      %57 = vmatpush.bf16.msra.mxu0 0
      %58 = vmatpush.bf16.msra.mxu0 0
      %59 = vmatpush.bf16.msra.mxu0 0
      %60 = vmatpush.bf16.msra.mxu0 0
      %61 = vmatpush.bf16.msra.mxu0 0
      %62 = vmatpush.bf16.msra.mxu0 0
      %63 = vmatpush.bf16.msra.mxu0 %v50
      %64 = vmatpush.bf16.msra.mxu0 %v49
      %65 = vmatmul.bf16.gmra.mxu0 %v55
      %v66 = vpop.f32.mrf.mxu0
      %v67 = vadd.f32 %v34, %v66
      %v68 = vpop.f32.mrf.mxu0
      %v69 = vadd.f32 %v34, %v68
      %70 = vdwg.mxu0
      %v71 = vmul.f32 %v67, %v67
      %v72 = vmul.f32 %v69, %v69
      %v73 = vmul.f32 %v67, %v71
      %v74 = vmul.f32 %v69, %v72
      %v75 = vmul.f32 %v73, 0.044715
      %v76 = vmul.f32 %v74, 0.044715
      %v77 = vadd.f32 %v67, %v75
      %v78 = vadd.f32 %v69, %v76
      %v79 = vmul.f32 %v77, 0.7978846
      %v80 = vmul.f32 %v78, 0.7978846
      %v81 = vtanh.pop %v79
      %v82 = vtanh.pop %v80
      %v83 = vadd.f32 %v81, 1.0
      %v84 = vadd.f32 %v82, 1.0
      %v85 = vmul.f32 %v83, 0.5
      %v86 = vmul.f32 %v84, 0.5
      %v87 = vmul.f32 %v67, %v85
      %v88 = vmul.f32 %v69, %v86
      %v89 = vpack.c.bf16 %v87, %v87
      %v90 = vpack.c.bf16 %v88, %v88
      %91 = vst [vmem:[#allocation2] sm:$0xf] %v89
      %92 = vst [vmem:[#allocation2 + $0x4] sm:$0xf] %v90
    $region25: #{_forward_impl.1} parent=1 // pred_fallthru
      _
    %v93 = vld [vmem:[#allocation2] sm:$0xf]
    %v94 = vld [vmem:[#allocation2 + $0x4] sm:$0xf]
    %v95 = vld [vmem:[%s3] sm:$0xff]
    %v96 = vld [vmem:[%s3 + $0x8] sm:$0xff]
    %v97 = vld [vmem:[%s3 + $0x10] sm:$0xff]
    %v98 = vld [vmem:[%s3 + $0x18] sm:$0xff]
    %v99 = vld [vmem:[%s3 + $0x20] sm:$0xff]
    %v100 = vld [vmem:[%s3 + $0x28] sm:$0xff]
    %v101 = vld [vmem:[%s3 + $0x30] sm:$0xff]
    %v102 = vld [vmem:[%s3 + $0x38] sm:$0xff]
    %v103 = vld [vmem:[%s3 + $0x40] sm:$0xff]
    %v104 = vld [vmem:[%s3 + $0x48] sm:$0xff]
    %v105 = vld [vmem:[%s3 + $0x50] sm:$0xff]
    %v106 = vld [vmem:[%s3 + $0x58] sm:$0xff]
    %v107 = vld [vmem:[%s3 + $0x60] sm:$0xff]
    %v108 = vld [vmem:[%s3 + $0x68] sm:$0xff]
    %v109 = vld [vmem:[%s3 + $0x70] sm:$0xff]
    %v110 = vld [vmem:[%s3 + $0x78] sm:$0xff]
    %v111 = vld [vmem:[%s4] sm:$0x3]
    %v113 = vperm.slane %v111, 0
    %v114 = vperm.slane %v111, 1
    %v119 = vunpack.c.l.b16 %v93
    %v120 = vunpack.c.l.b16 %v94
    %v121 = vpack.c.b16 %v120, %v119
    %v139 = vunpack.c.l.b16 %v95
    %v140 = vunpack.c.h.b16 %v95
    %v141 = vunpack.c.l.b16 %v96
    %v142 = vunpack.c.h.b16 %v96
    %v143 = vunpack.c.l.b16 %v97
    %v144 = vunpack.c.h.b16 %v97
    %v145 = vunpack.c.l.b16 %v98
    %v146 = vunpack.c.h.b16 %v98
    %v147 = vunpack.c.l.b16 %v99
    %v148 = vunpack.c.h.b16 %v99
    %v149 = vunpack.c.l.b16 %v100
    %v150 = vunpack.c.h.b16 %v100
    %v151 = vunpack.c.l.b16 %v101
    %v152 = vunpack.c.h.b16 %v101
    %v153 = vunpack.c.l.b16 %v102
    %v154 = vunpack.c.h.b16 %v102
    %v155 = vunpack.c.l.b16 %v103
    %v156 = vunpack.c.h.b16 %v103
    %v157 = vunpack.c.l.b16 %v104
    %v158 = vunpack.c.h.b16 %v104
    %v159 = vunpack.c.l.b16 %v105
    %v160 = vunpack.c.h.b16 %v105
    %v161 = vunpack.c.l.b16 %v106
    %v162 = vunpack.c.h.b16 %v106
    %v163 = vunpack.c.l.b16 %v107
    %v164 = vunpack.c.h.b16 %v107
    %v165 = vunpack.c.l.b16 %v108
    %v166 = vunpack.c.h.b16 %v108
    %v167 = vunpack.c.l.b16 %v109
    %v168 = vunpack.c.h.b16 %v109
    %v169 = vunpack.c.l.b16 %v110
    %v170 = vunpack.c.h.b16 %v110
    %v171 = vpack.c.b16 %v141, %v139
    %v172 = vpack.c.b16 %v142, %v140
    %v173 = vpack.c.b16 %v145, %v143
    %v174 = vpack.c.b16 %v146, %v144
    %v175 = vpack.c.b16 %v149, %v147
    %v176 = vpack.c.b16 %v150, %v148
    %v177 = vpack.c.b16 %v153, %v151
    %v178 = vpack.c.b16 %v154, %v152
    %v179 = vpack.c.b16 %v157, %v155
    %v180 = vpack.c.b16 %v158, %v156
    %v181 = vpack.c.b16 %v161, %v159
    %v182 = vpack.c.b16 %v162, %v160
    %v183 = vpack.c.b16 %v165, %v163
    %v184 = vpack.c.b16 %v166, %v164
    %v185 = vpack.c.b16 %v169, %v167
    %v186 = vpack.c.b16 %v170, %v168
    %203 = vmatpush.bf16.msra.mxu0 %v185
    %204 = vmatpush.bf16.msra.mxu0 %v183
    %205 = vmatpush.bf16.msra.mxu0 %v181
    %206 = vmatpush.bf16.msra.mxu0 %v179
    %207 = vmatpush.bf16.msra.mxu0 %v177
    %208 = vmatpush.bf16.msra.mxu0 %v175
    %209 = vmatpush.bf16.msra.mxu0 %v173
    %210 = vmatpush.bf16.msra.mxu0 %v171
    %211 = vmatmul.bf16.gmra.mxu0 %v121
    %v212 = vpop.f32.mrf.mxu0
    %v213 = vadd.f32 %v113, %v212
    %v214 = vpop.f32.mrf.mxu0
    %v215 = vadd.f32 %v113, %v214
    %216 = vdwg.mxu0
    %217 = vmatpush.bf16.msra.mxu0 %v186
    %218 = vmatpush.bf16.msra.mxu0 %v184
    %219 = vmatpush.bf16.msra.mxu0 %v182
    %220 = vmatpush.bf16.msra.mxu0 %v180
    %221 = vmatpush.bf16.msra.mxu0 %v178
    %222 = vmatpush.bf16.msra.mxu0 %v176
    %223 = vmatpush.bf16.msra.mxu0 %v174
    %224 = vmatpush.bf16.msra.mxu0 %v172
    %225 = vmatmul.bf16.gmra.mxu0 %v121
    %v226 = vpop.f32.mrf.mxu0
    %v227 = vadd.f32 %v114, %v226
    %v228 = vpop.f32.mrf.mxu0
    %v229 = vadd.f32 %v114, %v228
    %230 = vdwg.mxu0
    %231 = vst [vmem:[#allocation3] sm:$0xff] %v213
    %232 = vst [vmem:[#allocation3 + $0x8] sm:$0xff] %v227
    %233 = vst [vmem:[#allocation3 + $0x10] sm:$0xff] %v215
    %234 = vst [vmem:[#allocation3 + $0x18] sm:$0xff] %v229
    // Predicated region
    $region26: #{_forward_impl.1} parent=1 // pred_check
      _
    $region27: #{_forward_impl.1} parent=1 // pred_check_branch
      %236 = sbr.rel (0) target = $region29
    $region28: #{_forward_impl.1} parent=1 // pred_region
      %238 = vsyncadd [#allocation4], 0
      %s239 = sshll.u32 [#allocation3], 4
      %s240 = int_to_ptr.vmem [resolvable:$true] %s239
      %s241 = sshll.u32 %s5, 4
      %s242 = int_to_ptr.hbm [resolvable:$true] %s241
      %247 = dma.vmem_to_hbm [thread:$0]  %s240, 512, %s242, [#allocation4], 256, 256, 16
    $region29: #{_forward_impl.1} parent=1 // pred_fallthru
      _
    // Predicated region
    $region30: #{_forward_impl.1} parent=1 // pred_check
      _
    $region31: #{_forward_impl.1} parent=1 // pred_check_branch
      %249 = sbr.rel (0) target = $region33
    $region32: #{_forward_impl.1} parent=1 // pred_region
      %251 = dma.done [#allocation4], 512
    $region33: #{_forward_impl.1} parent=1 // pred_fallthru
      _
    %252 = vsyncpa [#allocation4], 1

</llo_original>
